<compile_context>
chip_gen: v5e
topology: v5e:2x2
jax: 0.10.0
libtpu: 0.0.40
codegen_flags: <defaults>
</compile_context>

<pallas_src>
import functools

import jax
import jax.numpy as jnp
from jax.experimental import pallas as pl
from jax.experimental.pallas import tpu as pltpu


def _round_up(x: int, m: int) -> int:
    return (x + m - 1) // m * m


def _splade_pool_kernel(mask_ref, x_ref, o_ref, acc_ref):
    # mask_ref: (TB, TS, 1)  f32 (0.0 / 1.0)
    # x_ref:    (TB, TS, TH) float
    # o_ref:    (TB, TH)     f32
    # acc_ref:  (TB, TH)     f32   running max over the seq grid axis
    s = pl.program_id(2)

    @pl.when(s == 0)
    def _():
        # relu guarantees the true result is >= 0, so 0 is the identity for
        # the running max (and gives log1p(0)=0 for fully-masked rows).
        acc_ref[...] = jnp.zeros_like(acc_ref)

    x = x_ref[...].astype(jnp.float32) * mask_ref[...]   # lane-broadcast multiply
    # max(acc, max_s(x)) with acc >= 0 already implements relu-then-max.
    acc_ref[...] = jnp.maximum(acc_ref[...], jnp.max(x, axis=1))

    @pl.when(s == pl.num_programs(2) - 1)
    def _():
        o_ref[...] = jnp.log1p(acc_ref[...])


@functools.partial(jax.jit, static_argnames=("tile_b", "tile_s", "tile_h"))
def splade_pooler(token_embeddings, attention_mask, *,
                  tile_b: int = 8, tile_s: int = 256, tile_h: int = 512):
    """token_embeddings: [B, S, H] float (f32 or bf16), attention_mask: [B, S]."""
    B, S, H = token_embeddings.shape

    # --- derive tile sizes / padded shapes -------------------------------
    tile_h = min(tile_h, _round_up(H, 128))      # lane dim: multiple of 128
    H_pad = _round_up(H, tile_h)

    tile_s = min(tile_s, _round_up(S, 8))        # sublane dim: multiple of 8
    S_pad = _round_up(S, tile_s)

    B_pad = _round_up(B, tile_b)

    # --- pad inputs; padded tokens get mask 0, padded lanes stay 0 -------
    x = token_embeddings
    if (B_pad, S_pad, H_pad) != (B, S, H):
        x = jnp.pad(x, ((0, B_pad - B), (0, S_pad - S), (0, H_pad - H)))
    mask_f = (attention_mask != 0).astype(jnp.float32)
    if (B_pad, S_pad) != (B, S):
        mask_f = jnp.pad(mask_f, ((0, B_pad - B), (0, S_pad - S)))
    mask_f = mask_f.reshape(B_pad, S_pad, 1)     # S on sublanes, free lane bcast

    grid = (B_pad // tile_b, H_pad // tile_h, S_pad // tile_s)

    out = pl.pallas_call(
        _splade_pool_kernel,
        out_shape=jax.ShapeDtypeStruct((B_pad, H_pad), jnp.float32),
        grid_spec=pltpu.PrefetchScalarGridSpec(
            num_scalar_prefetch=0,
            grid=grid,
            in_specs=[
                pl.BlockSpec((tile_b, tile_s, 1), lambda b, h, s: (b, s, 0)),
                pl.BlockSpec((tile_b, tile_s, tile_h), lambda b, h, s: (b, s, h)),
            ],
            out_specs=pl.BlockSpec((tile_b, tile_h), lambda b, h, s: (b, h)),
            scratch_shapes=[pltpu.VMEM((tile_b, tile_h), jnp.float32)],
        ),
        compiler_params=pltpu.CompilerParams(
            # batch / hidden are independent (megacore-shardable on v7x);
            # seq is the reduction axis -> last, arbitrary.
            dimension_semantics=("parallel", "parallel", "arbitrary"),
            # Headroom for the big double-buffered blocks (v5e default is 16 MiB).
            vmem_limit_bytes=64 * 1024 * 1024,
        ),
    )(mask_f, x)

    sentence_embedding = out[:B, :H]
    # Module returns the same tensor under two keys.
    return {
        "sentence_embedding": sentence_embedding,
        "sparse_sentence_embedding": sentence_embedding,
    }


def _reference(token_embeddings, attention_mask):
    x = jnp.where(attention_mask[:, :, None] == 0, 0.0,
                  token_embeddings.astype(jnp.float32))
    x = jnp.maximum(x, 0.0)
    return jnp.log1p(jnp.max(x, axis=1))


if __name__ == "__main__":
    # Small but padding-exercising shapes: S not a multiple of the seq tile,
    # H a non-512 multiple of 128.
    B, S, H = 8, 12, 384
    key = jax.random.PRNGKey(0)
    k_x, k_m = jax.random.split(key)

    token_embeddings = jax.random.normal(k_x, (B, S, H), dtype=jnp.float32)
    attention_mask = (jax.random.uniform(k_m, (B, S)) > 0.3).astype(jnp.int32)
    attention_mask = attention_mask.at[:, 0].set(1)  # every row has a valid token

    out = splade_pooler(token_embeddings, attention_mask)
    sent = jax.block_until_ready(out["sentence_embedding"])

    ref = _reference(token_embeddings, attention_mask)
    assert sent.shape == (B, H)
    assert jnp.allclose(sent, ref, atol=1e-6, rtol=1e-6), "mismatch vs reference"
    assert jnp.allclose(out["sparse_sentence_embedding"], ref, atol=1e-6, rtol=1e-6)

    print("KERNEL_OK")
</pallas_src>

<mosaic_0001>
module attributes {stable_mosaic.version = 11 : i64} {
  func.func @_splade_pool_kernel(%arg0: i32, %arg1: i32, %arg2: i32, %arg3: memref<8x16x1xf32, #tpu.memory_space<vmem>>, %arg4: memref<8x16x384xf32, #tpu.memory_space<vmem>>, %arg5: memref<8x384xf32, #tpu.memory_space<vmem>>, %arg6: memref<8x384xf32, #tpu.memory_space<vmem>>) attributes {dimension_semantics = [#tpu.dimension_semantics<parallel>, #tpu.dimension_semantics<parallel>, #tpu.dimension_semantics<arbitrary>], iteration_bounds = array<i64: 1, 1, 1>, scalar_prefetch = 0 : i64, scratch_operands = 1 : i64, tpu.core_type = #tpu.core_type<tc>, window_params = [{transform_indices = @transform_0, window_bounds = array<i64: 8, 16, 1>}, {transform_indices = @transform_1, window_bounds = array<i64: 8, 16, 384>}, {transform_indices = @transform_2, window_bounds = array<i64: 8, 384>}]} {
    %c0_i32 = arith.constant 0 : i32
    %0 = arith.cmpi eq, %arg2, %c0_i32 : i32
    %1 = arith.extui %0 : i1 to i32
    %c0_i32_0 = arith.constant 0 : i32
    %2 = arith.cmpi ne, %1, %c0_i32_0 : i32
    scf.if %2 {
      %cst_12 = arith.constant 0.000000e+00 : f32
      %14 = vector.broadcast %cst_12 : f32 to vector<8x384xf32>
      %c0_13 = arith.constant 0 : index
      %c0_14 = arith.constant 0 : index
      %15 = vector.load %arg6[%c0_13, %c0_14] : memref<8x384xf32, #tpu.memory_space<vmem>>, vector<8x384xf32>
      tpu.vector_store %arg6[%c0_13, %c0_14], %14 {strides = array<i32>} : memref<8x384xf32, #tpu.memory_space<vmem>>, vector<8x384xf32>,
    } else {
    }
    %c0 = arith.constant 0 : index
    %c0_1 = arith.constant 0 : index
    %c0_2 = arith.constant 0 : index
    %3 = vector.load %arg4[%c0, %c0_1, %c0_2] : memref<8x16x384xf32, #tpu.memory_space<vmem>>, vector<8x16x384xf32>
    %c0_3 = arith.constant 0 : index
    %c0_4 = arith.constant 0 : index
    %c0_5 = arith.constant 0 : index
    %4 = vector.load %arg3[%c0_3, %c0_4, %c0_5] : memref<8x16x1xf32, #tpu.memory_space<vmem>>, vector<8x16x1xf32>
    %5 = vector.broadcast %4 : vector<8x16x1xf32> to vector<8x16x384xf32>
    %6 = arith.mulf %3, %5 : vector<8x16x384xf32>
    %c0_6 = arith.constant 0 : index
    %c0_7 = arith.constant 0 : index
    %7 = vector.load %arg6[%c0_6, %c0_7] : memref<8x384xf32, #tpu.memory_space<vmem>>, vector<8x384xf32>
    %cst = arith.constant dense<0xFF800000> : vector<8x384xf32>
    %8 = vector.multi_reduction <maximumf>, %6, %cst [1] : vector<8x16x384xf32> to vector<8x384xf32>
    %9 = arith.maximumf %7, %8 : vector<8x384xf32>
    %c0_8 = arith.constant 0 : index
    %c0_9 = arith.constant 0 : index
    %10 = vector.load %arg6[%c0_8, %c0_9] : memref<8x384xf32, #tpu.memory_space<vmem>>, vector<8x384xf32>
    tpu.vector_store %arg6[%c0_8, %c0_9], %9 {strides = array<i32>} : memref<8x384xf32, #tpu.memory_space<vmem>>, vector<8x384xf32>,
    %c0_i32_10 = arith.constant 0 : i32
    %11 = arith.cmpi eq, %arg2, %c0_i32_10 : i32
    %12 = arith.extui %11 : i1 to i32
    %c0_i32_11 = arith.constant 0 : i32
    %13 = arith.cmpi ne, %12, %c0_i32_11 : i32
    scf.if %13 {
      %c0_12 = arith.constant 0 : index
      %c0_13 = arith.constant 0 : index
      %14 = vector.load %arg6[%c0_12, %c0_13] : memref<8x384xf32, #tpu.memory_space<vmem>>, vector<8x384xf32>
      %15 = math.log1p %14 : vector<8x384xf32>
      %c0_14 = arith.constant 0 : index
      %c0_15 = arith.constant 0 : index
      %16 = vector.load %arg5[%c0_14, %c0_15] : memref<8x384xf32, #tpu.memory_space<vmem>>, vector<8x384xf32>
      tpu.vector_store %arg5[%c0_14, %c0_15], %15 {strides = array<i32>} : memref<8x384xf32, #tpu.memory_space<vmem>>, vector<8x384xf32>,
    } else {
    }
    return
  }
  func.func @transform_0(%arg0: i32, %arg1: i32, %arg2: i32) -> (i32, i32, i32) {
    %c0_i32 = arith.constant 0 : i32
    %c0_i32_0 = arith.constant 0 : i32
    return %arg0, %arg2, %c0_i32 : i32, i32, i32
  }
  func.func @transform_1(%arg0: i32, %arg1: i32, %arg2: i32) -> (i32, i32, i32) {
    %c0_i32 = arith.constant 0 : i32
    return %arg0, %arg2, %arg1 : i32, i32, i32
  }
  func.func @transform_2(%arg0: i32, %arg1: i32, %arg2: i32) -> (i32, i32) {
    %c0_i32 = arith.constant 0 : i32
    return %arg0, %arg1 : i32, i32
  }
}

</mosaic_0001>

<llo_original>
// kernel: splade_pooler.1
$region0: #{splade_pooler.1}
  #allocation0 [shape = 'u32[]', space=smem, size = 0x4, offset = 0x4, fixed_abs, tag = 'smem constant byte address 0x4 - core index']
  #allocation1 [shape = 'u32[72,128]{1,0:T(1,128)}', space=vmem, size = 0x9000, scoped, tag = 'internal scratch']
  #allocation2 [shape = 'f32[8,384]{1,0:T(8,128)}', space=vmem, size = 0x3000, scoped, tag = 'scratch operand']
  %s0 = inlined_call_operand.vmem [shape: f32[8,16,1], index: 0, kind: input, shape index: {}]
  %s1 = inlined_call_operand.vmem [shape: f32[8,16,384], index: 1, kind: input, shape index: {}]
  %s2 = inlined_call_operand.vmem [shape: f32[8,384], index: 2, kind: output, shape index: {}]
  %s3 = sld [smem:[#allocation0]]
  $region26: #{splade_pooler.1} parent=0
    _
  %s5 = ssub.s32 1, %s3
  %s6 = scalar_select 0, %s5, %s3
  // Predicated region
  $region2: #{splade_pooler.1} parent=0 // pred_check
    _
  $region3: #{splade_pooler.1} parent=0 // pred_check_branch
    %8 = sbr.rel (0) target = $region5
  $region4: #{splade_pooler.1} parent=0 // pred_region
    _
  $region5: #{splade_pooler.1} parent=0 // pred_fallthru
    _
  // Predicated region
  $region6: #{splade_pooler.1} parent=0 // pred_check
    _
  $region7: #{splade_pooler.1} parent=0 // pred_check_branch
    %10 = sbr.rel (0) target = $region9
  $region8: #{splade_pooler.1} parent=0 // pred_region
    _
  $region9: #{splade_pooler.1} parent=0 // pred_fallthru
    _
  %p11 = scmp.eq.s32.totalorder 0, 0
  // Predicated region
  $region10: #{splade_pooler.1} parent=0 // pred_check
    %p12 = pneg %p11
  $region11: #{splade_pooler.1} parent=0 // pred_check_branch
    %14 = sbr.rel (%p12) target = $region13
  $region12: #{splade_pooler.1} parent=0 // pred_region
    %15 = vst [vmem:[#allocation2] sm:$0xff] 0.0
    %16 = vst [vmem:[#allocation2 + $0x8] sm:$0xff] 0.0
    %17 = vst [vmem:[#allocation2 + $0x10] sm:$0xff] 0.0
  $region13: #{splade_pooler.1} parent=0 // pred_fallthru
    _
  %v18 = vld [vmem:[%s1] sm:$0xff]
  %v19 = vld [vmem:[%s1 + $0x8] sm:$0xff]
  %v20 = vld [vmem:[%s1 + $0x10] sm:$0xff]
  %v21 = vld [vmem:[%s1 + $0x18] sm:$0xff]
  %v22 = vld [vmem:[%s1 + $0x20] sm:$0xff]
  %v23 = vld [vmem:[%s1 + $0x28] sm:$0xff]
  %v24 = vld [vmem:[%s1 + $0x30] sm:$0xff]
  %v25 = vld [vmem:[%s1 + $0x38] sm:$0xff]
  %v26 = vld [vmem:[%s1 + $0x40] sm:$0xff]
  %v27 = vld [vmem:[%s1 + $0x48] sm:$0xff]
  %v28 = vld [vmem:[%s1 + $0x50] sm:$0xff]
  %v29 = vld [vmem:[%s1 + $0x58] sm:$0xff]
  %v30 = vld [vmem:[%s1 + $0x60] sm:$0xff]
  %v31 = vld [vmem:[%s1 + $0x68] sm:$0xff]
  %v32 = vld [vmem:[%s1 + $0x70] sm:$0xff]
  %v33 = vld [vmem:[%s1 + $0x78] sm:$0xff]
  %v34 = vld [vmem:[%s1 + $0x80] sm:$0xff]
  %v35 = vld [vmem:[%s1 + $0x88] sm:$0xff]
  %v36 = vld [vmem:[%s1 + $0x90] sm:$0xff]
  %v37 = vld [vmem:[%s1 + $0x98] sm:$0xff]
  %v38 = vld [vmem:[%s1 + $0xa0] sm:$0xff]
  %v39 = vld [vmem:[%s1 + $0xa8] sm:$0xff]
  %v40 = vld [vmem:[%s1 + $0xb0] sm:$0xff]
  %v41 = vld [vmem:[%s1 + $0xb8] sm:$0xff]
  %v42 = vld [vmem:[%s1 + $0xc0] sm:$0xff]
  %v43 = vld [vmem:[%s1 + $0xc8] sm:$0xff]
  %v44 = vld [vmem:[%s1 + $0xd0] sm:$0xff]
  %v45 = vld [vmem:[%s1 + $0xd8] sm:$0xff]
  %v46 = vld [vmem:[%s1 + $0xe0] sm:$0xff]
  %v47 = vld [vmem:[%s1 + $0xe8] sm:$0xff]
  %v48 = vld [vmem:[%s1 + $0xf0] sm:$0xff]
  %v49 = vld [vmem:[%s1 + $0xf8] sm:$0xff]
  %v50 = vld [vmem:[%s1 + $0x100] sm:$0xff]
  %v51 = vld [vmem:[%s1 + $0x108] sm:$0xff]
  %v52 = vld [vmem:[%s1 + $0x110] sm:$0xff]
  %v53 = vld [vmem:[%s1 + $0x118] sm:$0xff]
  %v54 = vld [vmem:[%s1 + $0x120] sm:$0xff]
  %v55 = vld [vmem:[%s1 + $0x128] sm:$0xff]
  %v56 = vld [vmem:[%s1 + $0x130] sm:$0xff]
  %v57 = vld [vmem:[%s1 + $0x138] sm:$0xff]
  %v58 = vld [vmem:[%s1 + $0x140] sm:$0xff]
  %v59 = vld [vmem:[%s1 + $0x148] sm:$0xff]
  %v60 = vld [vmem:[%s1 + $0x150] sm:$0xff]
  %v61 = vld [vmem:[%s1 + $0x158] sm:$0xff]
  %v62 = vld [vmem:[%s1 + $0x160] sm:$0xff]
  %v63 = vld [vmem:[%s1 + $0x168] sm:$0xff]
  %v64 = vld [vmem:[%s1 + $0x170] sm:$0xff]
  %v65 = vld [vmem:[%s1 + $0x178] sm:$0xff]
  %v66 = vld [vmem:[%s0] sm:$0xff]
  %v67 = vld [vmem:[%s0 + $0x8] sm:$0xff]
  %v68 = vld [vmem:[%s0 + $0x10] sm:$0xff]
  %v69 = vld [vmem:[%s0 + $0x18] sm:$0xff]
  %v70 = vld [vmem:[%s0 + $0x20] sm:$0xff]
  %v71 = vld [vmem:[%s0 + $0x28] sm:$0xff]
  %v72 = vld [vmem:[%s0 + $0x30] sm:$0xff]
  %v73 = vld [vmem:[%s0 + $0x38] sm:$0xff]
  %v74 = vld [vmem:[%s0 + $0x40] sm:$0xff]
  %v75 = vld [vmem:[%s0 + $0x48] sm:$0xff]
  %v76 = vld [vmem:[%s0 + $0x50] sm:$0xff]
  %v77 = vld [vmem:[%s0 + $0x58] sm:$0xff]
  %v78 = vld [vmem:[%s0 + $0x60] sm:$0xff]
  %v79 = vld [vmem:[%s0 + $0x68] sm:$0xff]
  %v80 = vld [vmem:[%s0 + $0x70] sm:$0xff]
  %v81 = vld [vmem:[%s0 + $0x78] sm:$0xff]
  %83 = vset.pattern.permute.xlu0 0
  %84 = vperm.xlu0 %83, %v66
  %v85 = vpop.permute.xlu0 %84
  %88 = vset.pattern.permute.xlu0 0
  %89 = vperm.xlu0 %88, %v67
  %v90 = vpop.permute.xlu0 %89
  %93 = vset.pattern.permute.xlu0 0
  %94 = vperm.xlu0 %93, %v68
  %v95 = vpop.permute.xlu0 %94
  %98 = vset.pattern.permute.xlu0 0
  %99 = vperm.xlu0 %98, %v69
  %v100 = vpop.permute.xlu0 %99
  %103 = vset.pattern.permute.xlu0 0
  %104 = vperm.xlu0 %103, %v70
  %v105 = vpop.permute.xlu0 %104
  %108 = vset.pattern.permute.xlu0 0
  %109 = vperm.xlu0 %108, %v71
  %v110 = vpop.permute.xlu0 %109
  %113 = vset.pattern.permute.xlu0 0
  %114 = vperm.xlu0 %113, %v72
  %v115 = vpop.permute.xlu0 %114
  %118 = vset.pattern.permute.xlu0 0
  %119 = vperm.xlu0 %118, %v73
  %v120 = vpop.permute.xlu0 %119
  %123 = vset.pattern.permute.xlu0 0
  %124 = vperm.xlu0 %123, %v74
  %v125 = vpop.permute.xlu0 %124
  %128 = vset.pattern.permute.xlu0 0
  %129 = vperm.xlu0 %128, %v75
  %v130 = vpop.permute.xlu0 %129
  %133 = vset.pattern.permute.xlu0 0
  %134 = vperm.xlu0 %133, %v76
  %v135 = vpop.permute.xlu0 %134
  %138 = vset.pattern.permute.xlu0 0
  %139 = vperm.xlu0 %138, %v77
  %v140 = vpop.permute.xlu0 %139
  %143 = vset.pattern.permute.xlu0 0
  %144 = vperm.xlu0 %143, %v78
  %v145 = vpop.permute.xlu0 %144
  %148 = vset.pattern.permute.xlu0 0
  %149 = vperm.xlu0 %148, %v79
  %v150 = vpop.permute.xlu0 %149
  %153 = vset.pattern.permute.xlu0 0
  %154 = vperm.xlu0 %153, %v80
  %v155 = vpop.permute.xlu0 %154
  %158 = vset.pattern.permute.xlu0 0
  %159 = vperm.xlu0 %158, %v81
  %v160 = vpop.permute.xlu0 %159
  %v162 = vmul.f32 %v18, %v85
  %v163 = vmul.f32 %v19, %v85
  %v164 = vmul.f32 %v20, %v85
  %v165 = vmul.f32 %v21, %v90
  %v166 = vmul.f32 %v22, %v90
  %v167 = vmul.f32 %v23, %v90
  %v168 = vmul.f32 %v24, %v95
  %v169 = vmul.f32 %v25, %v95
  %v170 = vmul.f32 %v26, %v95
  %v171 = vmul.f32 %v27, %v100
  %v172 = vmul.f32 %v28, %v100
  %v173 = vmul.f32 %v29, %v100
  %v174 = vmul.f32 %v30, %v105
  %v175 = vmul.f32 %v31, %v105
  %v176 = vmul.f32 %v32, %v105
  %v177 = vmul.f32 %v33, %v110
  %v178 = vmul.f32 %v34, %v110
  %v179 = vmul.f32 %v35, %v110
  %v180 = vmul.f32 %v36, %v115
  %v181 = vmul.f32 %v37, %v115
  %v182 = vmul.f32 %v38, %v115
  %v183 = vmul.f32 %v39, %v120
  %v184 = vmul.f32 %v40, %v120
  %v185 = vmul.f32 %v41, %v120
  %v186 = vmul.f32 %v42, %v125
  %v187 = vmul.f32 %v43, %v125
  %v188 = vmul.f32 %v44, %v125
  %v189 = vmul.f32 %v45, %v130
  %v190 = vmul.f32 %v46, %v130
  %v191 = vmul.f32 %v47, %v130
  %v192 = vmul.f32 %v48, %v135
  %v193 = vmul.f32 %v49, %v135
  %v194 = vmul.f32 %v50, %v135
  %v195 = vmul.f32 %v51, %v140
  %v196 = vmul.f32 %v52, %v140
  %v197 = vmul.f32 %v53, %v140
  %v198 = vmul.f32 %v54, %v145
  %v199 = vmul.f32 %v55, %v145
  %v200 = vmul.f32 %v56, %v145
  %v201 = vmul.f32 %v57, %v150
  %v202 = vmul.f32 %v58, %v150
  %v203 = vmul.f32 %v59, %v150
  %v204 = vmul.f32 %v60, %v155
  %v205 = vmul.f32 %v61, %v155
  %v206 = vmul.f32 %v62, %v155
  %v207 = vmul.f32 %v63, %v160
  %v208 = vmul.f32 %v64, %v160
  %v209 = vmul.f32 %v65, %v160
  %v210 = vld [vmem:[#allocation2] sm:$0xff]
  %v211 = vld [vmem:[#allocation2 + $0x8] sm:$0xff]
  %v212 = vld [vmem:[#allocation2 + $0x10] sm:$0xff]
  %v213 = vmax.f32 %v162, %v165
  %v214 = vrot.slane %v213, 4
  %v215 = vmax.f32 %v213, %v214
  %v216 = vrot.slane %v215, 2
  %v217 = vmax.f32 %v215, %v216
  %v218 = vrot.slane %v217, 1
  %v219 = vmax.f32 %v217, %v218
  %v220 = vmax.f32 %v163, %v166
  %v221 = vrot.slane %v220, 4
  %v222 = vmax.f32 %v220, %v221
  %v223 = vrot.slane %v222, 2
  %v224 = vmax.f32 %v222, %v223
  %v225 = vrot.slane %v224, 1
  %v226 = vmax.f32 %v224, %v225
  %v227 = vmax.f32 %v164, %v167
  %v228 = vrot.slane %v227, 4
  %v229 = vmax.f32 %v227, %v228
  %v230 = vrot.slane %v229, 2
  %v231 = vmax.f32 %v229, %v230
  %v232 = vrot.slane %v231, 1
  %v233 = vmax.f32 %v231, %v232
  %v234 = vmax.f32 %v168, %v171
  %v235 = vrot.slane %v234, 4
  %v236 = vmax.f32 %v234, %v235
  %v237 = vrot.slane %v236, 2
  %v238 = vmax.f32 %v236, %v237
  %v239 = vrot.slane %v238, 1
  %v240 = vmax.f32 %v238, %v239
  %v241 = vmax.f32 %v169, %v172
  %v242 = vrot.slane %v241, 4
  %v243 = vmax.f32 %v241, %v242
  %v244 = vrot.slane %v243, 2
  %v245 = vmax.f32 %v243, %v244
  %v246 = vrot.slane %v245, 1
  %v247 = vmax.f32 %v245, %v246
  %v248 = vmax.f32 %v170, %v173
  %v249 = vrot.slane %v248, 4
  %v250 = vmax.f32 %v248, %v249
  %v251 = vrot.slane %v250, 2
  %v252 = vmax.f32 %v250, %v251
  %v253 = vrot.slane %v252, 1
  %v254 = vmax.f32 %v252, %v253
  %v255 = vmax.f32 %v174, %v177
  %v256 = vrot.slane %v255, 4
  %v257 = vmax.f32 %v255, %v256
  %v258 = vrot.slane %v257, 2
  %v259 = vmax.f32 %v257, %v258
  %v260 = vrot.slane %v259, 1
  %v261 = vmax.f32 %v259, %v260
  %v262 = vmax.f32 %v175, %v178
  %v263 = vrot.slane %v262, 4
  %v264 = vmax.f32 %v262, %v263
  %v265 = vrot.slane %v264, 2
  %v266 = vmax.f32 %v264, %v265
  %v267 = vrot.slane %v266, 1
  %v268 = vmax.f32 %v266, %v267
  %v269 = vmax.f32 %v176, %v179
  %v270 = vrot.slane %v269, 4
  %v271 = vmax.f32 %v269, %v270
  %v272 = vrot.slane %v271, 2
  %v273 = vmax.f32 %v271, %v272
  %v274 = vrot.slane %v273, 1
  %v275 = vmax.f32 %v273, %v274
  %v276 = vmax.f32 %v180, %v183
  %v277 = vrot.slane %v276, 4
  %v278 = vmax.f32 %v276, %v277
  %v279 = vrot.slane %v278, 2
  %v280 = vmax.f32 %v278, %v279
  %v281 = vrot.slane %v280, 1
  %v282 = vmax.f32 %v280, %v281
  %v283 = vmax.f32 %v181, %v184
  %v284 = vrot.slane %v283, 4
  %v285 = vmax.f32 %v283, %v284
  %v286 = vrot.slane %v285, 2
  %v287 = vmax.f32 %v285, %v286
  %v288 = vrot.slane %v287, 1
  %v289 = vmax.f32 %v287, %v288
  %v290 = vmax.f32 %v182, %v185
  %v291 = vrot.slane %v290, 4
  %v292 = vmax.f32 %v290, %v291
  %v293 = vrot.slane %v292, 2
  %v294 = vmax.f32 %v292, %v293
  %v295 = vrot.slane %v294, 1
  %v296 = vmax.f32 %v294, %v295
  %v297 = vmax.f32 %v186, %v189
  %v298 = vrot.slane %v297, 4
  %v299 = vmax.f32 %v297, %v298
  %v300 = vrot.slane %v299, 2
  %v301 = vmax.f32 %v299, %v300
  %v302 = vrot.slane %v301, 1
  %v303 = vmax.f32 %v301, %v302
  %v304 = vmax.f32 %v187, %v190
  %v305 = vrot.slane %v304, 4
  %v306 = vmax.f32 %v304, %v305
  %v307 = vrot.slane %v306, 2
  %v308 = vmax.f32 %v306, %v307
  %v309 = vrot.slane %v308, 1
  %v310 = vmax.f32 %v308, %v309
  %v311 = vmax.f32 %v188, %v191
  %v312 = vrot.slane %v311, 4
  %v313 = vmax.f32 %v311, %v312
  %v314 = vrot.slane %v313, 2
  %v315 = vmax.f32 %v313, %v314
  %v316 = vrot.slane %v315, 1
  %v317 = vmax.f32 %v315, %v316
  %v318 = vmax.f32 %v192, %v195
  %v319 = vrot.slane %v318, 4
  %v320 = vmax.f32 %v318, %v319
  %v321 = vrot.slane %v320, 2
  %v322 = vmax.f32 %v320, %v321
  %v323 = vrot.slane %v322, 1
  %v324 = vmax.f32 %v322, %v323
  %v325 = vmax.f32 %v193, %v196
  %v326 = vrot.slane %v325, 4
  %v327 = vmax.f32 %v325, %v326
  %v328 = vrot.slane %v327, 2
  %v329 = vmax.f32 %v327, %v328
  %v330 = vrot.slane %v329, 1
  %v331 = vmax.f32 %v329, %v330
  %v332 = vmax.f32 %v194, %v197
  %v333 = vrot.slane %v332, 4
  %v334 = vmax.f32 %v332, %v333
  %v335 = vrot.slane %v334, 2
  %v336 = vmax.f32 %v334, %v335
  %v337 = vrot.slane %v336, 1
  %v338 = vmax.f32 %v336, %v337
  %v339 = vmax.f32 %v198, %v201
  %v340 = vrot.slane %v339, 4
  %v341 = vmax.f32 %v339, %v340
  %v342 = vrot.slane %v341, 2
  %v343 = vmax.f32 %v341, %v342
  %v344 = vrot.slane %v343, 1
  %v345 = vmax.f32 %v343, %v344
  %v346 = vmax.f32 %v199, %v202
  %v347 = vrot.slane %v346, 4
  %v348 = vmax.f32 %v346, %v347
  %v349 = vrot.slane %v348, 2
  %v350 = vmax.f32 %v348, %v349
  %v351 = vrot.slane %v350, 1
  %v352 = vmax.f32 %v350, %v351
  %v353 = vmax.f32 %v200, %v203
  %v354 = vrot.slane %v353, 4
  %v355 = vmax.f32 %v353, %v354
  %v356 = vrot.slane %v355, 2
  %v357 = vmax.f32 %v355, %v356
  %v358 = vrot.slane %v357, 1
  %v359 = vmax.f32 %v357, %v358
  %v360 = vmax.f32 %v204, %v207
  %v361 = vrot.slane %v360, 4
  %v362 = vmax.f32 %v360, %v361
  %v363 = vrot.slane %v362, 2
  %v364 = vmax.f32 %v362, %v363
  %v365 = vrot.slane %v364, 1
  %v366 = vmax.f32 %v364, %v365
  %v367 = vmax.f32 %v205, %v208
  %v368 = vrot.slane %v367, 4
  %v369 = vmax.f32 %v367, %v368
  %v370 = vrot.slane %v369, 2
  %v371 = vmax.f32 %v369, %v370
  %v372 = vrot.slane %v371, 1
  %v373 = vmax.f32 %v371, %v372
  %v374 = vmax.f32 %v206, %v209
  %v375 = vrot.slane %v374, 4
  %v376 = vmax.f32 %v374, %v375
  %v377 = vrot.slane %v376, 2
  %v378 = vmax.f32 %v376, %v377
  %v379 = vrot.slane %v378, 1
  %v380 = vmax.f32 %v378, %v379
  %vm405 = vcmask 1041409
  %v406 = vsel %vm405, %v240, %v219
  %vm407 = vcmask 1042434
  %v408 = vsel %vm407, %v261, %v406
  %vm409 = vcmask 1043459
  %v410 = vsel %vm409, %v282, %v408
  %vm411 = vcmask 1044484
  %v412 = vsel %vm411, %v303, %v410
  %vm413 = vcmask 1045509
  %v414 = vsel %vm413, %v324, %v412
  %vm415 = vcmask 1046534
  %v416 = vsel %vm415, %v345, %v414
  %vm417 = vcmask 1047559
  %v418 = vsel %vm417, %v366, %v416
  %v419 = vsel %vm405, %v247, %v226
  %v420 = vsel %vm407, %v268, %v419
  %v421 = vsel %vm409, %v289, %v420
  %v422 = vsel %vm411, %v310, %v421
  %v423 = vsel %vm413, %v331, %v422
  %v424 = vsel %vm415, %v352, %v423
  %v425 = vsel %vm417, %v373, %v424
  %v426 = vsel %vm405, %v254, %v233
  %v427 = vsel %vm407, %v275, %v426
  %v428 = vsel %vm409, %v296, %v427
  %v429 = vsel %vm411, %v317, %v428
  %v430 = vsel %vm413, %v338, %v429
  %v431 = vsel %vm415, %v359, %v430
  %v432 = vsel %vm417, %v380, %v431
  %v436 = vmax.f32 %v210, %v418
  %v437 = vmax.f32 %v211, %v425
  %v438 = vmax.f32 %v212, %v432
  %439 = vst [vmem:[#allocation2] sm:$0xff] %v436
  %440 = vst [vmem:[#allocation2 + $0x8] sm:$0xff] %v437
  %441 = vst [vmem:[#allocation2 + $0x10] sm:$0xff] %v438
  // Predicated region
  $region14: #{splade_pooler.1} parent=0 // pred_check
    %p442 = pneg %p11
  $region15: #{splade_pooler.1} parent=0 // pred_check_branch
    %444 = sbr.rel (%p442) target = $region17
  $region16: #{splade_pooler.1} parent=0 // pred_region
    %v445 = vld [vmem:[#allocation2] sm:$0xff]
    %v446 = vld [vmem:[#allocation2 + $0x8] sm:$0xff]
    %v447 = vld [vmem:[#allocation2 + $0x10] sm:$0xff]
    %v448 = vadd.f32 %v445, 1.0
    %v449 = vlog2.pop %v448
    %v450 = vmul.f32 %v449, 0.6931472
    %v451 = vmul.f32 -0.5, %v445
    %v452 = vadd.f32 %v451, 1.0
    %v453 = vmul.f32 %v452, %v445
    %v454 = vand.u32 2147483647, %v445
    %vm455 = vcmp.lt.f32.partialorder %v454, 0.0004427343
    %v456 = vsel %vm455, %v453, %v450
    %v457 = vadd.f32 %v446, 1.0
    %v458 = vlog2.pop %v457
    %v459 = vmul.f32 %v458, 0.6931472
    %v460 = vmul.f32 -0.5, %v446
    %v461 = vadd.f32 %v460, 1.0
    %v462 = vmul.f32 %v461, %v446
    %v463 = vand.u32 2147483647, %v446
    %vm464 = vcmp.lt.f32.partialorder %v463, 0.0004427343
    %v465 = vsel %vm464, %v462, %v459
    %v466 = vadd.f32 %v447, 1.0
    %v467 = vlog2.pop %v466
    %v468 = vmul.f32 %v467, 0.6931472
    %v469 = vmul.f32 -0.5, %v447
    %v470 = vadd.f32 %v469, 1.0
    %v471 = vmul.f32 %v470, %v447
    %v472 = vand.u32 2147483647, %v447
    %vm473 = vcmp.lt.f32.partialorder %v472, 0.0004427343
    %v474 = vsel %vm473, %v471, %v468
    %475 = vst [vmem:[%s2] sm:$0xff] %v456
    %476 = vst [vmem:[%s2 + $0x8] sm:$0xff] %v465
    %477 = vst [vmem:[%s2 + $0x10] sm:$0xff] %v474
  $region17: #{splade_pooler.1} parent=0 // pred_fallthru
    _
  // Predicated region
  $region18: #{splade_pooler.1} parent=0 // pred_check
    _
  $region19: #{splade_pooler.1} parent=0 // pred_check_branch
    %479 = sbr.rel (0) target = $region21
  $region20: #{splade_pooler.1} parent=0 // pred_region
    _
  $region21: #{splade_pooler.1} parent=0 // pred_fallthru
    _
  // Predicated region
  $region22: #{splade_pooler.1} parent=0 // pred_check
    _
  $region23: #{splade_pooler.1} parent=0 // pred_check_branch
    %481 = sbr.rel (0) target = $region25
  $region24: #{splade_pooler.1} parent=0 // pred_region
    _
  $region25: #{splade_pooler.1} parent=0 // pred_fallthru
    _

</llo_original>
